<compile_context>
chip_gen: v5e
topology: v5e:2x2
jax: 0.10.0
libtpu: 0.0.40
codegen_flags: <defaults>
</compile_context>

<pallas_src>
import math

import numpy as np

import jax
import jax.numpy as jnp
from jax.experimental import pallas as pl
from jax.experimental.pallas import tpu as pltpu


def _lerp_table(in_size, scale):
    """PyTorch F.interpolate(mode='*linear', align_corners=False) taps/weights."""
    out_size = int(math.floor(in_size * scale))
    o = np.arange(out_size, dtype=np.float64)
    src = (o + 0.5) / scale - 0.5
    src = np.clip(src, 0.0, float(in_size - 1))
    i0 = np.floor(src).astype(np.int32)
    i1 = np.minimum(i0 + 1, in_size - 1).astype(np.int32)
    w1 = (src - i0).astype(np.float32)
    w0 = (1.0 - w1).astype(np.float32)
    return out_size, i0, i1, w0, w1


def _interp_matrix(in_size, scale):
    out_size, i0, i1, w0, w1 = _lerp_table(in_size, scale)
    a = np.zeros((out_size, in_size), dtype=np.float32)
    rows = np.arange(out_size)
    a[rows, i0] += w0
    a[rows, i1] += w1
    return a  # (out_size, in_size)


def _pick_row_tile(nc, p_out, out_bytes):
    """Row-tile size (leading dim -> no 8-alignment needed) + padded row count."""
    # Keep the double-buffered output block under ~8 MiB per step.
    cap = max(1, min(256, (8 * 1024 * 1024) // max(1, 2 * p_out * out_bytes)))
    if nc <= cap:
        return nc, nc
    best = 1
    for t in range(cap, 0, -1):
        if nc % t == 0:
            best = t
            break
    if best >= max(1, cap // 2):
        return best, nc                      # exact divisor -> no padding at all
    n_tiles = -(-nc // cap)                  # minimal padding fallback
    tm = -(-nc // n_tiles)
    return tm, tm * n_tiles


def _upsample_kernel(d0_ref, d1_ref,          # scalar-prefetch (SMEM int32, used by index_maps)
                     w0_ref, w1_ref,          # SMEM f32: per-output-depth lerp weights
                     x0_ref, x1_ref,          # (tm, 1, Hin, Win): the two source depth planes
                     aw_ref,                  # (Wout, Win)  W-interp matrix (compute dtype)
                     ah_ref,                  # (Hout, Hin)  H-interp matrix (compute dtype)
                     o_ref):                  # (tm, 1, Hout, Wout)
    od = pl.program_id(1)
    wd0 = w0_ref[od]
    wd1 = w1_ref[od]

    x0 = jnp.squeeze(x0_ref[...], axis=1)                      # (tm, Hin, Win)
    x1 = jnp.squeeze(x1_ref[...], axis=1)
    # Depth lerp on the small (pre-expansion) planes -> cheap VPU work.
    v = wd0 * x0.astype(jnp.float32) + wd1 * x1.astype(jnp.float32)

    tm, h_in, w_in = v.shape
    w_out = aw_ref.shape[0]
    h_out = ah_ref.shape[0]
    cdt = aw_ref.dtype                                          # MXU operand dtype

    # W expansion: batched matmul, contraction over the minor dims only.
    aw_b = jnp.broadcast_to(aw_ref[...], (tm, w_out, w_in))     # (tm, Wout, Win)
    y = jnp.einsum('mhw,mWw->mhW', v.astype(cdt), aw_b,
                   preferred_element_type=jnp.float32)          # (tm, Hin, Wout)

    # H expansion: batched matmul (bqk,bkd->bqd pattern).
    ah_b = jnp.broadcast_to(ah_ref[...], (tm, h_out, h_in))     # (tm, Hout, Hin)
    z = jnp.einsum('mHh,mhW->mHW', ah_b, y.astype(cdt),
                   preferred_element_type=jnp.float32)          # (tm, Hout, Wout)

    o_ref[...] = z.reshape(tm, 1, h_out, w_out).astype(o_ref.dtype)


def scale_upsample_forward(x, scale_factor, mode="trilinear", align_corners=False,
                           compute_dtype=jnp.bfloat16):
    """ScaleUpsample.forward for use_deconv=False (trilinear, align_corners=False)."""
    assert mode == "trilinear" and not align_corners
    n, c, d_in, h_in, w_in = x.shape
    sf = float(scale_factor)

    # Static interpolation tables (numpy, trace-time).
    d_out, d_i0, d_i1, d_w0, d_w1 = _lerp_table(d_in, sf)
    a_h = _interp_matrix(h_in, sf)                       # (Hout, Hin)
    a_w = _interp_matrix(w_in, sf)                       # (Wout, Win)
    h_out, w_out = a_h.shape[0], a_w.shape[0]
    p_in, p_out = h_in * w_in, h_out * w_out

    out_dtype = x.dtype
    in_bytes = np.dtype(x.dtype).itemsize
    out_bytes = np.dtype(out_dtype).itemsize
    c_bytes = np.dtype(compute_dtype).itemsize

    nc = n * c
    tm, nc_pad = _pick_row_tile(nc, p_out, out_bytes)
    grid_m = nc_pad // tm

    # Free view of contiguous NCDHW; pad rows only in the (rare) ragged case.
    x4 = x.reshape(nc, d_in, h_in, w_in)
    if nc_pad != nc:
        x4 = jnp.pad(x4, ((0, nc_pad - nc), (0, 0), (0, 0), (0, 0)))

    d0 = jnp.asarray(d_i0, dtype=jnp.int32)
    d1 = jnp.asarray(d_i1, dtype=jnp.int32)
    w0 = jnp.asarray(d_w0, dtype=jnp.float32)
    w1 = jnp.asarray(d_w1, dtype=jnp.float32)
    aw = jnp.asarray(a_w, dtype=compute_dtype)           # (Wout, Win)
    ah = jnp.asarray(a_h, dtype=compute_dtype)           # (Hout, Hin)

    steps = grid_m * d_out
    flops = steps * tm * (3 * p_in
                          + 2 * h_in * w_in * w_out
                          + 2 * h_in * w_out * h_out)
    bytes_accessed = (steps * (2 * tm * p_in * in_bytes + tm * p_out * out_bytes)
                      + (aw.size + ah.size) * c_bytes)

    # Real per-step VMEM budget (double-buffered by the pipeline).
    per_step_vmem = (2 * 2 * tm * p_in * in_bytes                 # two depth planes
                     + 2 * (aw.size + ah.size) * c_bytes          # interp matrices
                     + 2 * tm * p_out * out_bytes)                # output block
    vmem_limit = int(min(max(2 * per_step_vmem + (8 << 20), 32 << 20), 60 << 20))

    grid_spec = pltpu.PrefetchScalarGridSpec(
        num_scalar_prefetch=2,                            # d0, d1 -> SMEM, used by index_maps
        grid=(grid_m, d_out),
        in_specs=[
            pl.BlockSpec(memory_space=pltpu.MemorySpace.SMEM),    # w0 (D_out,)
            pl.BlockSpec(memory_space=pltpu.MemorySpace.SMEM),    # w1 (D_out,)
            pl.BlockSpec((tm, 1, h_in, w_in),
                         lambda i, od, d0r, d1r: (i, d0r[od], 0, 0)),
            pl.BlockSpec((tm, 1, h_in, w_in),
                         lambda i, od, d0r, d1r: (i, d1r[od], 0, 0)),
            pl.BlockSpec((w_out, w_in), lambda i, od, d0r, d1r: (0, 0)),
            pl.BlockSpec((h_out, h_in), lambda i, od, d0r, d1r: (0, 0)),
        ],
        out_specs=pl.BlockSpec((tm, 1, h_out, w_out),
                               lambda i, od, d0r, d1r: (i, od, 0, 0)),
    )

    out4 = pl.pallas_call(
        _upsample_kernel,
        out_shape=jax.ShapeDtypeStruct((nc_pad, d_out, h_out, w_out), out_dtype),
        grid_spec=grid_spec,
        compiler_params=pltpu.CompilerParams(
            dimension_semantics=("parallel", "parallel"),
            vmem_limit_bytes=vmem_limit),
        cost_estimate=pl.CostEstimate(flops=int(flops), transcendentals=0,
                                      bytes_accessed=int(bytes_accessed)),
    )(d0, d1, w0, w1, x4, x4, aw, ah)

    if nc_pad != nc:
        out4 = out4[:nc]
    # Free reshape: NC-major layout was produced directly by the kernel.
    return out4.reshape(n, c, d_out, h_out, w_out)


def reference_forward(x, scale_factor):
    """Pure-JAX reference: separable gather + lerp per axis (PyTorch half-pixel
    + clamp semantics, align_corners=False)."""
    def interp_axis(v, axis):
        in_size = v.shape[axis]
        out_size, i0, i1, w0, w1 = _lerp_table(in_size, float(scale_factor))
        v0 = jnp.take(v, jnp.asarray(i0), axis=axis)
        v1 = jnp.take(v, jnp.asarray(i1), axis=axis)
        shape = [1] * v.ndim
        shape[axis] = out_size
        return v0 * jnp.asarray(w0).reshape(shape) + v1 * jnp.asarray(w1).reshape(shape)

    y = interp_axis(x, 2)
    y = interp_axis(y, 3)
    return interp_axis(y, 4)


if __name__ == "__main__":
    key = jax.random.PRNGKey(0)
    configs = [
        ((2, 4, 8, 8, 8), 2),   # Wout = 16, NC = 8 -> single row tile, no padding
        ((1, 3, 4, 6, 5), 2),   # ragged everywhere: NC=3 tile, Hin=6, Win=5
    ]
    for idx, (shape, sf) in enumerate(configs):
        key, sub = jax.random.split(key)
        x = jax.random.normal(sub, shape, dtype=jnp.float32)
        ref = jax.block_until_ready(reference_forward(x, sf))

        # Default: bf16 MXU operands, f32 accumulation -> loose tolerance.
        out = jax.block_until_ready(scale_upsample_forward(x, sf))
        assert out.shape == ref.shape, f"shape mismatch cfg {idx}: {out.shape} vs {ref.shape}"
        assert jnp.allclose(out, ref, rtol=3e-2, atol=3e-2), f"bf16 value mismatch cfg {idx}"

        # f32 operands -> tight tolerance.
        out32 = jax.block_until_ready(
            scale_upsample_forward(x, sf, compute_dtype=jnp.float32))
        assert jnp.allclose(out32, ref, rtol=1e-5, atol=1e-5), f"f32 value mismatch cfg {idx}"

    print("KERNEL_OK")
</pallas_src>

<mosaic_0001>
module attributes {stable_mosaic.version = 11 : i64} {
  func.func @_upsample_kernel(%arg0: i32, %arg1: i32, %arg2: memref<16xi32, #tpu.memory_space<smem>>, %arg3: memref<16xi32, #tpu.memory_space<smem>>, %arg4: memref<16xf32, #tpu.memory_space<smem>>, %arg5: memref<16xf32, #tpu.memory_space<smem>>, %arg6: memref<8x1x8x8xf32, #tpu.memory_space<vmem>>, %arg7: memref<8x1x8x8xf32, #tpu.memory_space<vmem>>, %arg8: memref<16x8xbf16, #tpu.memory_space<vmem>>, %arg9: memref<16x8xbf16, #tpu.memory_space<vmem>>, %arg10: memref<8x1x16x16xf32, #tpu.memory_space<vmem>>) attributes {dimension_semantics = [#tpu.dimension_semantics<parallel>, #tpu.dimension_semantics<parallel>], iteration_bounds = array<i64: 1, 16>, scalar_prefetch = 2 : i64, scratch_operands = 0 : i64, tpu.core_type = #tpu.core_type<tc>, window_params = [{transform_indices = @transform_0, window_bounds = array<i64: 16>}, {transform_indices = @transform_1, window_bounds = array<i64: 16>}, {transform_indices = @transform_2, window_bounds = array<i64: 8, 1, 8, 8>}, {transform_indices = @transform_3, window_bounds = array<i64: 8, 1, 8, 8>}, {pipeline_mode = #tpu.pipeline_mode<synchronous>, transform_indices = @transform_4, window_bounds = array<i64: 16, 8>}, {pipeline_mode = #tpu.pipeline_mode<synchronous>, transform_indices = @transform_5, window_bounds = array<i64: 16, 8>}, {transform_indices = @transform_6, window_bounds = array<i64: 8, 1, 16, 16>}]} {
    %0 = arith.index_cast %arg1 : i32 to index
    %1 = memref.load %arg4[%0] : memref<16xf32, #tpu.memory_space<smem>>
    %2 = arith.index_cast %arg1 : i32 to index
    %3 = memref.load %arg5[%2] : memref<16xf32, #tpu.memory_space<smem>>
    %c0 = arith.constant 0 : index
    %c0_0 = arith.constant 0 : index
    %c0_1 = arith.constant 0 : index
    %c0_2 = arith.constant 0 : index
    %4 = vector.load %arg6[%c0, %c0_0, %c0_1, %c0_2] : memref<8x1x8x8xf32, #tpu.memory_space<vmem>>, vector<8x1x8x8xf32>
    %5 = vector.shape_cast %4 : vector<8x1x8x8xf32> to vector<8x8x8xf32>
    %c0_3 = arith.constant 0 : index
    %c0_4 = arith.constant 0 : index
    %c0_5 = arith.constant 0 : index
    %c0_6 = arith.constant 0 : index
    %6 = vector.load %arg7[%c0_3, %c0_4, %c0_5, %c0_6] : memref<8x1x8x8xf32, #tpu.memory_space<vmem>>, vector<8x1x8x8xf32>
    %7 = vector.shape_cast %6 : vector<8x1x8x8xf32> to vector<8x8x8xf32>
    %8 = vector.broadcast %1 : f32 to vector<8x8x8xf32>
    %9 = arith.mulf %8, %5 : vector<8x8x8xf32>
    %10 = vector.broadcast %3 : f32 to vector<8x8x8xf32>
    %11 = arith.mulf %10, %7 : vector<8x8x8xf32>
    %12 = arith.addf %9, %11 : vector<8x8x8xf32>
    %c0_7 = arith.constant 0 : index
    %c0_8 = arith.constant 0 : index
    %13 = vector.load %arg8[%c0_7, %c0_8] : memref<16x8xbf16, #tpu.memory_space<vmem>>, vector<16x8xbf16>
    %14 = vector.shape_cast %13 : vector<16x8xbf16> to vector<1x16x8xbf16>
    %15 = vector.broadcast %14 : vector<1x16x8xbf16> to vector<8x16x8xbf16>
    %16 = arith.truncf %12 : vector<8x8x8xf32> to vector<8x8x8xbf16>
    "tpu.trace_start"() <{level = 10 : i32, message = "mhw,mWw->mhW"}> : () -> ()
    %cst = arith.constant dense<0.000000e+00> : vector<8x8x16xf32>
    %17 = tpu.matmul %16, %15, %cst {dimension_numbers = #tpu.dot_dimension_numbers<[2], [2], [1], [1], [0, 0, 0, 1, 1, 1], [0], [0]>} : vector<8x8x8xbf16>, vector<8x16x8xbf16>, vector<8x8x16xf32> -> vector<8x8x16xf32>
    "tpu.trace_stop"() : () -> ()
    %c0_9 = arith.constant 0 : index
    %c0_10 = arith.constant 0 : index
    %18 = vector.load %arg9[%c0_9, %c0_10] : memref<16x8xbf16, #tpu.memory_space<vmem>>, vector<16x8xbf16>
    %19 = vector.shape_cast %18 : vector<16x8xbf16> to vector<1x16x8xbf16>
    %20 = vector.broadcast %19 : vector<1x16x8xbf16> to vector<8x16x8xbf16>
    %21 = arith.truncf %17 : vector<8x8x16xf32> to vector<8x8x16xbf16>
    "tpu.trace_start"() <{level = 10 : i32, message = "mHh,mhW->mHW"}> : () -> ()
    %cst_11 = arith.constant dense<0.000000e+00> : vector<8x16x16xf32>
    %22 = tpu.matmul %20, %21, %cst_11 {dimension_numbers = #tpu.dot_dimension_numbers<[2], [1], [1], [2], [0, 0, 0, 1, 1, 2], [0], [0]>} : vector<8x16x8xbf16>, vector<8x8x16xbf16>, vector<8x16x16xf32> -> vector<8x16x16xf32>
    "tpu.trace_stop"() : () -> ()
    %23 = vector.shape_cast %22 : vector<8x16x16xf32> to vector<8x1x16x16xf32>
    %c0_12 = arith.constant 0 : index
    %c0_13 = arith.constant 0 : index
    %c0_14 = arith.constant 0 : index
    %c0_15 = arith.constant 0 : index
    %24 = vector.load %arg10[%c0_12, %c0_13, %c0_14, %c0_15] : memref<8x1x16x16xf32, #tpu.memory_space<vmem>>, vector<8x1x16x16xf32>
    tpu.vector_store %arg10[%c0_12, %c0_13, %c0_14, %c0_15], %23 {strides = array<i32>} : memref<8x1x16x16xf32, #tpu.memory_space<vmem>>, vector<8x1x16x16xf32>,
    return
  }
  func.func @transform_0(%arg0: i32, %arg1: i32, %arg2: memref<16xi32, #tpu.memory_space<smem>>, %arg3: memref<16xi32, #tpu.memory_space<smem>>) -> i32 {
    %c0_i32 = arith.constant 0 : i32
    %c0_i32_0 = arith.constant 0 : i32
    return %c0_i32 : i32
  }
  func.func @transform_1(%arg0: i32, %arg1: i32, %arg2: memref<16xi32, #tpu.memory_space<smem>>, %arg3: memref<16xi32, #tpu.memory_space<smem>>) -> i32 {
    %c0_i32 = arith.constant 0 : i32
    %c0_i32_0 = arith.constant 0 : i32
    return %c0_i32 : i32
  }
  func.func @transform_2(%arg0: i32, %arg1: i32, %arg2: memref<16xi32, #tpu.memory_space<smem>>, %arg3: memref<16xi32, #tpu.memory_space<smem>>) -> (i32, i32, i32, i32) {
    %0 = arith.index_cast %arg1 : i32 to index
    %1 = memref.load %arg2[%0] : memref<16xi32, #tpu.memory_space<smem>>
    %c0_i32 = arith.constant 0 : i32
    %c0_i32_0 = arith.constant 0 : i32
    %c0_i32_1 = arith.constant 0 : i32
    return %arg0, %1, %c0_i32, %c0_i32_0 : i32, i32, i32, i32
  }
  func.func @transform_3(%arg0: i32, %arg1: i32, %arg2: memref<16xi32, #tpu.memory_space<smem>>, %arg3: memref<16xi32, #tpu.memory_space<smem>>) -> (i32, i32, i32, i32) {
    %0 = arith.index_cast %arg1 : i32 to index
    %1 = memref.load %arg3[%0] : memref<16xi32, #tpu.memory_space<smem>>
    %c0_i32 = arith.constant 0 : i32
    %c0_i32_0 = arith.constant 0 : i32
    %c0_i32_1 = arith.constant 0 : i32
    return %arg0, %1, %c0_i32, %c0_i32_0 : i32, i32, i32, i32
  }
  func.func @transform_4(%arg0: i32, %arg1: i32, %arg2: memref<16xi32, #tpu.memory_space<smem>>, %arg3: memref<16xi32, #tpu.memory_space<smem>>) -> (i32, i32) {
    %c0_i32 = arith.constant 0 : i32
    %c0_i32_0 = arith.constant 0 : i32
    %c0_i32_1 = arith.constant 0 : i32
    return %c0_i32, %c0_i32_0 : i32, i32
  }
  func.func @transform_5(%arg0: i32, %arg1: i32, %arg2: memref<16xi32, #tpu.memory_space<smem>>, %arg3: memref<16xi32, #tpu.memory_space<smem>>) -> (i32, i32) {
    %c0_i32 = arith.constant 0 : i32
    %c0_i32_0 = arith.constant 0 : i32
    %c0_i32_1 = arith.constant 0 : i32
    return %c0_i32, %c0_i32_0 : i32, i32
  }
  func.func @transform_6(%arg0: i32, %arg1: i32, %arg2: memref<16xi32, #tpu.memory_space<smem>>, %arg3: memref<16xi32, #tpu.memory_space<smem>>) -> (i32, i32, i32, i32) {
    %c0_i32 = arith.constant 0 : i32
    %c0_i32_0 = arith.constant 0 : i32
    %c0_i32_1 = arith.constant 0 : i32
    return %arg0, %arg1, %c0_i32, %c0_i32_0 : i32, i32, i32, i32
  }
}

</mosaic_0001>

<llo_original>
// kernel: tpu_custom_call.1
$region0: #{tpu_custom_call.1}
  #allocation0 [shape = 'u32[]', space=smem, size = 0x4, offset = 0x4, fixed_abs, tag = 'smem constant byte address 0x4 - core index']
  #allocation1 [shape = 'u32[72,128]{1,0:T(1,128)}', space=vmem, size = 0x9000, scoped, tag = 'internal scratch']
  #allocation2 [shape = 's32[1]{0}', space=sflag, size = 0x4, scoped, tag = 'scoped memory for tpu_custom_call.1']
  #allocation3 [shape = 'u8[512]{0}', space=smem, size = 0x200, scoped, tag = 'prefetched SMEM operand 0']
  #allocation4 [shape = 'u8[512]{0}', space=smem, size = 0x200, scoped, tag = 'prefetched SMEM operand 1']
  #allocation15 [shape = 's32[]', space=sflag, size = 0x4, offset = 0, fixed_abs, tag = 'sflag constant byte address 0x0 - dummy sync flag']
  %s0 = inlined_call_operand.vmem [shape: s32[16], index: 0, kind: input, shape index: {}]
  %s1 = inlined_call_operand.vmem [shape: s32[16], index: 1, kind: input, shape index: {}]
  %s2 = inlined_call_operand.vmem [shape: f32[16], index: 2, kind: input, shape index: {}]
  %s3 = inlined_call_operand.vmem [shape: f32[16], index: 3, kind: input, shape index: {}]
  %s4 = inlined_call_operand.hbm [shape: f32[8,8,8,8], index: 4, kind: input, shape index: {}]
  %s5 = inlined_call_operand.hbm [shape: f32[8,8,8,8], index: 5, kind: input, shape index: {}]
  %s6 = inlined_call_operand.vmem [shape: bf16[16,8], index: 6, kind: input, shape index: {}]
  %s7 = inlined_call_operand.vmem [shape: bf16[16,8], index: 7, kind: input, shape index: {}]
  %s8 = inlined_call_operand.hbm [shape: f32[8,16,16,16], index: 8, kind: output, shape index: {}]
  %s9 = sld [smem:[#allocation0]]
  $region73: #{tpu_custom_call.1} parent=0
    _
  %s11 = ssub.s32 1, %s9
  %s12 = scalar_select 0, %s11, %s9
  %s14 = sshll.u32 %s0, 4
  %s15 = int_to_ptr.vmem [resolvable:$true] %s14
  %17 = dma.vmem_to_smem %s15, 16, [#allocation3], [#allocation2]
  %s19 = sshll.u32 %s1, 4
  %s20 = int_to_ptr.vmem [resolvable:$true] %s19
  %22 = dma.vmem_to_smem %s20, 16, [#allocation4], [#allocation2]
  %24 = dma.done [#allocation2], 32
  %25 = sfence
  $region1: #{tpu_custom_call.1} parent=0
    #allocation5 [shape = 'u8[512]{0}', space=smem, size = 0x200, scoped, tag = 'input window, operand 2, single buffered']
    #allocation6 [shape = 's32[2]{0}', space=sflag, size = 0x8, scoped, tag = 'scoped memory for tpu_custom_call.1']
    #allocation7 [shape = 's32[2]{0}', space=sflag, size = 0x8, scoped, tag = 'scoped memory for tpu_custom_call.1']
    #allocation8 [shape = 's32[2]{0}', space=sflag, size = 0x8, scoped, tag = 'scoped memory for tpu_custom_call.1']
    #allocation9 [shape = 'u8[512]{0}', space=smem, size = 0x200, scoped, tag = 'input window, operand 3, single buffered']
    #allocation10 [shape = 's32[1]{0}', space=sflag, size = 0x4, scoped, tag = 'scoped memory for tpu_custom_call.1']
    #allocation11 [shape = 'u8[65536]{0}', space=vmem, size = 0x10000, scoped, tag = 'input window, operand 4']
    #allocation12 [shape = 'u8[65536]{0}', space=vmem, size = 0x10000, scoped, tag = 'input window, operand 5']
    #allocation13 [shape = 's32[2]{0}', space=sflag, size = 0x8, scoped, tag = 'scoped memory for tpu_custom_call.1']
    #allocation14 [shape = 'u8[131072]{0}', space=vmem, size = 0x20000, scoped, tag = 'output window, operand 0']
    %26 = vsyncpa [#allocation8], 0
    %27 = vsyncpa [#allocation10], 0
    %28 = vsyncpa [#allocation6], 0
    %s29 = scalar_lea.sflag [#allocation6], 1
    %30 = vsyncpa %s29, 0
    %31 = vsyncpa [#allocation13], 0
    %s32 = scalar_lea.sflag [#allocation13], 1
    %33 = vsyncpa %s32, 0
    %34 = vsyncpa [#allocation7], 0
    %s35 = scalar_lea.sflag [#allocation7], 1
    %36 = vsyncpa %s35, 0
    loop: start=0, step=1, limit=18
    $region2: #{tpu_custom_call.1} parent=1 // loop_pre_header
      _
    $region3: #{tpu_custom_call.1} parent=1 // loop_header
      %s38 = sphi 0, %s42
      %p39 = scmp.ge.s32.totalorder %s38, 18
      %s45 = sphi 0, %s57
      %s46 = sphi 0, %s53
      %s47 = sphi 0, %s45
      %s48 = sphi 0, %s46
      %s49 = sphi 0, %s47
      %s50 = sphi 0, %s48
      %s58 = sphi 0, %s58
      %s60 = sphi 0, %s58
      %s61 = sphi 0, %s60
      %s75 = sphi 0, %s61
      %s79 = sphi 0, %s79
      %s81 = sphi 0, %s79
      %s82 = sphi 0, %s81
      %s96 = sphi 0, %s82
      %s106 = sphi 0, %s108
      %s109 = sphi 0, %s106
      %s110 = sphi 0, %s109
      %s126 = sphi 0, %s110
      %s136 = sphi 0, %s138
      %s139 = sphi 0, %s136
      %s140 = sphi 0, %s139
      %s156 = sphi 0, %s140
      %s160 = sphi 0, %s160
      %s162 = sphi 0, %s160
      %s163 = sphi 0, %s162
      %s177 = sphi 0, %s163
      %s181 = sphi 0, %s181
      %s183 = sphi 0, %s181
      %s184 = sphi 0, %s183
      %s198 = sphi 0, %s184
      %s206 = sphi 0, %s208
      %s209 = sphi 0, %s206
      %s210 = sphi 0, %s209
      %s226 = sphi 0, %s210
    $region4: #{tpu_custom_call.1} parent=1 // loop_header_branch
      %41 = sbr.rel (%p39) target = $region8
    $region5: #{tpu_custom_call.1} parent=1 // loop_body
      %s43 = ssub.s32 %s38, 1
      %s44 = ssub.s32 %s38, 2
      %s51 = sadd.s32 1, %s46
      %p52 = scmp.ge.s32.totalorder %s51, 16
      %s53 = scalar_select %p52, 0, %s51
      %s54 = sadd.s32 1, %s45
      %s55 = scalar_select %p52, %s54, %s45
      %p56 = scmp.ge.s32.totalorder %s55, 1
      %s57 = scalar_select %p56, 0, %s55
      %s59 = sadd.s32 %s58, 1
      %p62 = scmp.eq.s32.totalorder %s38, 15
      %p63 = scmp.ne.s32.totalorder %s58, %s60
      %p64 = scmp.eq.s32.totalorder %s38, 0
      %p65 = por %p63, %p64
      %p66 = scmp.ne.s32.totalorder %s58, %s60
      %p67 = scmp.eq.s32.totalorder %s43, 15
      %p68 = por %p66, %p67
      %p69 = scmp.ne.s32.totalorder %s60, %s61
      %p70 = scmp.eq.s32.totalorder %s43, 0
      %p71 = por %p69, %p70
      %p72 = scmp.ne.s32.totalorder %s60, %s61
      %p73 = scmp.eq.s32.totalorder %s44, 15
      %p74 = por %p72, %p73
      %p76 = scmp.ne.s32.totalorder %s61, %s75
      %p77 = scmp.eq.s32.totalorder %s44, 0
      %p78 = por %p76, %p77
      %s80 = sadd.s32 %s79, 1
      %p83 = scmp.eq.s32.totalorder %s38, 15
      %p84 = scmp.ne.s32.totalorder %s79, %s81
      %p85 = scmp.eq.s32.totalorder %s38, 0
      %p86 = por %p84, %p85
      %p87 = scmp.ne.s32.totalorder %s79, %s81
      %p88 = scmp.eq.s32.totalorder %s43, 15
      %p89 = por %p87, %p88
      %p90 = scmp.ne.s32.totalorder %s81, %s82
      %p91 = scmp.eq.s32.totalorder %s43, 0
      %p92 = por %p90, %p91
      %p93 = scmp.ne.s32.totalorder %s81, %s82
      %p94 = scmp.eq.s32.totalorder %s44, 15
      %p95 = por %p93, %p94
      %p97 = scmp.ne.s32.totalorder %s82, %s96
      %p98 = scmp.eq.s32.totalorder %s44, 0
      %p99 = por %p97, %p98
      %s100 = sld [smem:[#allocation3 + %s46]]
      %s101 = sld [smem:[#allocation3 + %s53]]
      %s102 = ssub.s32 %s45, %s57
      %s103 = ssub.s32 %s100, %s101
      %s104 = sor.u32 %s102, %s103
      %p105 = scmp.eq.s32.totalorder %s104, 0
      %s107 = sadd.s32 %s106, 1
      %s108 = scalar_select %p105, %s106, %s107
      %p111 = pneg %p105
      %p112 = scmp.eq.s32.totalorder %s38, 15
      %p113 = por %p111, %p112
      %p114 = scmp.ne.s32.totalorder %s106, %s109
      %p115 = scmp.eq.s32.totalorder %s38, 0
      %p116 = por %p114, %p115
      %p117 = scmp.ne.s32.totalorder %s106, %s109
      %p118 = scmp.eq.s32.totalorder %s43, 15
      %p119 = por %p117, %p118
      %p120 = scmp.ne.s32.totalorder %s109, %s110
      %p121 = scmp.eq.s32.totalorder %s43, 0
      %p122 = por %p120, %p121
      %p123 = scmp.ne.s32.totalorder %s109, %s110
      %p124 = scmp.eq.s32.totalorder %s44, 15
      %p125 = por %p123, %p124
      %p127 = scmp.ne.s32.totalorder %s110, %s126
      %p128 = scmp.eq.s32.totalorder %s44, 0
      %p129 = por %p127, %p128
      %s130 = sld [smem:[#allocation4 + %s46]]
      %s131 = sld [smem:[#allocation4 + %s53]]
      %s132 = ssub.s32 %s45, %s57
      %s133 = ssub.s32 %s130, %s131
      %s134 = sor.u32 %s132, %s133
      %p135 = scmp.eq.s32.totalorder %s134, 0
      %s137 = sadd.s32 %s136, 1
      %s138 = scalar_select %p135, %s136, %s137
      %p141 = pneg %p135
      %p142 = scmp.eq.s32.totalorder %s38, 15
      %p143 = por %p141, %p142
      %p144 = scmp.ne.s32.totalorder %s136, %s139
      %p145 = scmp.eq.s32.totalorder %s38, 0
      %p146 = por %p144, %p145
      %p147 = scmp.ne.s32.totalorder %s136, %s139
      %p148 = scmp.eq.s32.totalorder %s43, 15
      %p149 = por %p147, %p148
      %p150 = scmp.ne.s32.totalorder %s139, %s140
      %p151 = scmp.eq.s32.totalorder %s43, 0
      %p152 = por %p150, %p151
      %p153 = scmp.ne.s32.totalorder %s139, %s140
      %p154 = scmp.eq.s32.totalorder %s44, 15
      %p155 = por %p153, %p154
      %p157 = scmp.ne.s32.totalorder %s140, %s156
      %p158 = scmp.eq.s32.totalorder %s44, 0
      %p159 = por %p157, %p158
      %s161 = sadd.s32 %s160, 1
      %p164 = scmp.eq.s32.totalorder %s38, 15
      %p165 = scmp.ne.s32.totalorder %s160, %s162
      %p166 = scmp.eq.s32.totalorder %s38, 0
      %p167 = por %p165, %p166
      %p168 = scmp.ne.s32.totalorder %s160, %s162
      %p169 = scmp.eq.s32.totalorder %s43, 15
      %p170 = por %p168, %p169
      %p171 = scmp.ne.s32.totalorder %s162, %s163
      %p172 = scmp.eq.s32.totalorder %s43, 0
      %p173 = por %p171, %p172
      %p174 = scmp.ne.s32.totalorder %s162, %s163
      %p175 = scmp.eq.s32.totalorder %s44, 15
      %p176 = por %p174, %p175
      %p178 = scmp.ne.s32.totalorder %s163, %s177
      %p179 = scmp.eq.s32.totalorder %s44, 0
      %p180 = por %p178, %p179
      %s182 = sadd.s32 %s181, 1
      %p185 = scmp.eq.s32.totalorder %s38, 15
      %p186 = scmp.ne.s32.totalorder %s181, %s183
      %p187 = scmp.eq.s32.totalorder %s38, 0
      %p188 = por %p186, %p187
      %p189 = scmp.ne.s32.totalorder %s181, %s183
      %p190 = scmp.eq.s32.totalorder %s43, 15
      %p191 = por %p189, %p190
      %p192 = scmp.ne.s32.totalorder %s183, %s184
      %p193 = scmp.eq.s32.totalorder %s43, 0
      %p194 = por %p192, %p193
      %p195 = scmp.ne.s32.totalorder %s183, %s184
      %p196 = scmp.eq.s32.totalorder %s44, 15
      %p197 = por %p195, %p196
      %p199 = scmp.ne.s32.totalorder %s184, %s198
      %p200 = scmp.eq.s32.totalorder %s44, 0
      %p201 = por %p199, %p200
      %s202 = ssub.s32 %s45, %s57
      %s203 = ssub.s32 %s46, %s53
      %s204 = sor.u32 %s202, %s203
      %p205 = scmp.eq.s32.totalorder %s204, 0
      %s207 = sadd.s32 %s206, 1
      %s208 = scalar_select %p205, %s206, %s207
      %p211 = pneg %p205
      %p212 = scmp.eq.s32.totalorder %s38, 15
      %p213 = por %p211, %p212
      %p214 = scmp.ne.s32.totalorder %s206, %s209
      %p215 = scmp.eq.s32.totalorder %s38, 0
      %p216 = por %p214, %p215
      %p217 = scmp.ne.s32.totalorder %s206, %s209
      %p218 = scmp.eq.s32.totalorder %s43, 15
      %p219 = por %p217, %p218
      %p220 = scmp.ne.s32.totalorder %s209, %s210
      %p221 = scmp.eq.s32.totalorder %s43, 0
      %p222 = por %p220, %p221
      %p223 = scmp.ne.s32.totalorder %s209, %s210
      %p224 = scmp.eq.s32.totalorder %s44, 15
      %p225 = por %p223, %p224
      %p227 = scmp.ne.s32.totalorder %s210, %s226
      %p228 = scmp.eq.s32.totalorder %s44, 0
      %p229 = por %p227, %p228
      %p230 = scmp.le.s32.totalorder 1, %s38
      %p231 = scmp.lt.s32.totalorder %s38, 17
      %p232 = pnand %p230, %p231
      %p233 = pneg %p232
      // Predicated region
      $region9: #{tpu_custom_call.1} parent=5 // pred_check
        _
      $region10: #{tpu_custom_call.1} parent=5 // pred_check_branch
        %235 = sbr.rel (%p232) target = $region12
      $region11: #{tpu_custom_call.1} parent=5 // pred_region
        %s236 = ssub.s32 %s38, 1
        // Predicated region
        $region13: #{tpu_custom_call.1} parent=11 // pred_check
          %p237 = pneg %p71
        $region14: #{tpu_custom_call.1} parent=11 // pred_check_branch
          %239 = sbr.rel (%p237) target = $region16
        $region15: #{tpu_custom_call.1} parent=11 // pred_region
          %241 = vsyncadd [#allocation8], 0
          %s243 = sshll.u32 %s2, 4
          %s244 = int_to_ptr.vmem [resolvable:$true] %s243
          %246 = dma.vmem_to_smem %s244, 16, [#allocation5], [#allocation8]
        $region16: #{tpu_custom_call.1} parent=11 // pred_fallthru
          _
        // Predicated region
        $region17: #{tpu_custom_call.1} parent=11 // pred_check
          %p247 = pneg %p92
        $region18: #{tpu_custom_call.1} parent=11 // pred_check_branch
          %249 = sbr.rel (%p247) target = $region20
        $region19: #{tpu_custom_call.1} parent=11 // pred_region
          %251 = vsyncadd [#allocation10], 0
          %s253 = sshll.u32 %s3, 4
          %s254 = int_to_ptr.vmem [resolvable:$true] %s253
          %256 = dma.vmem_to_smem %s254, 16, [#allocation9], [#allocation10]
        $region20: #{tpu_custom_call.1} parent=11 // pred_fallthru
          _
        // Predicated region
        $region21: #{tpu_custom_call.1} parent=11 // pred_check
          %p257 = pneg %p173
        $region22: #{tpu_custom_call.1} parent=11 // pred_check_branch
          %259 = sbr.rel (%p257) target = $region24
        $region23: #{tpu_custom_call.1} parent=11 // pred_region
          _
        $region24: #{tpu_custom_call.1} parent=11 // pred_fallthru
          _
        // Predicated region
        $region25: #{tpu_custom_call.1} parent=11 // pred_check
          %p260 = pneg %p194
        $region26: #{tpu_custom_call.1} parent=11 // pred_check_branch
          %262 = sbr.rel (%p260) target = $region28
        $region27: #{tpu_custom_call.1} parent=11 // pred_region
          _
        $region28: #{tpu_custom_call.1} parent=11 // pred_fallthru
          _
      $region12: #{tpu_custom_call.1} parent=5 // pred_fallthru
        _
      %p263 = scmp.lt.s32.totalorder %s38, 16
      // Predicated region
      $region29: #{tpu_custom_call.1} parent=5 // pred_check
        %p264 = pneg %p263
      $region30: #{tpu_custom_call.1} parent=5 // pred_check_branch
        %266 = sbr.rel (%p264) target = $region32
      $region31: #{tpu_custom_call.1} parent=5 // pred_region
        // Predicated region
        $region33: #{tpu_custom_call.1} parent=31 // pred_check
          %p267 = pneg %p116
        $region34: #{tpu_custom_call.1} parent=31 // pred_check_branch
          %269 = sbr.rel (%p267) target = $region36
        $region35: #{tpu_custom_call.1} parent=31 // pred_region
          %s270 = sand.u32 %s106, 1
          %s271 = scalar_lea.sflag [#allocation6], %s270
          %s272 = sand.u32 %s106, 1
          %s273 = smul.addr %s272, 64
          %s274 = scalar_lea.vmem [#allocation11], %s273
          %s275 = sld [smem:[#allocation3 + %s46]]
          %s276 = smul.u32 8, %s45
          %278 = vsyncadd %s271, 0
          %s279 = smul.addr %s276, 8
          %s280 = sadd.s32 %s275, %s279
          %s281 = smul.addr %s280, 8
          %s282 = scalar_lea.hbm %s4, %s281
          %s283 = sshll.u32 %s282, 4
          %s284 = int_to_ptr.hbm [resolvable:$true] %s283
          %s285 = sshll.u32 %s274, 4
          %s286 = int_to_ptr.vmem [resolvable:$true] %s285
          %291 = dma.hbm_to_vmem [thread:$0]  %s284, 1024, %s286, %s271, 1024, 128, 8
        $region36: #{tpu_custom_call.1} parent=31 // pred_fallthru
          _
        // Predicated region
        $region37: #{tpu_custom_call.1} parent=31 // pred_check
          %p292 = pneg %p146
        $region38: #{tpu_custom_call.1} parent=31 // pred_check_branch
          %294 = sbr.rel (%p292) target = $region40
        $region39: #{tpu_custom_call.1} parent=31 // pred_region
          %s295 = sand.u32 %s136, 1
          %s296 = scalar_lea.sflag [#allocation13], %s295
          %s297 = sand.u32 %s136, 1
          %s298 = smul.addr %s297, 64
          %s299 = scalar_lea.vmem [#allocation12], %s298
          %s300 = sld [smem:[#allocation4 + %s46]]
          %s301 = smul.u32 8, %s45
          %303 = vsyncadd %s296, 0
          %s304 = smul.addr %s301, 8
          %s305 = sadd.s32 %s300, %s304
          %s306 = smul.addr %s305, 8
          %s307 = scalar_lea.hbm %s5, %s306
          %s308 = sshll.u32 %s307, 4
          %s309 = int_to_ptr.hbm [resolvable:$true] %s308
          %s310 = sshll.u32 %s299, 4
          %s311 = int_to_ptr.vmem [resolvable:$true] %s310
          %316 = dma.hbm_to_vmem [thread:$0]  %s309, 1024, %s311, %s296, 1024, 128, 8
        $region40: #{tpu_custom_call.1} parent=31 // pred_fallthru
          _
      $region32: #{tpu_custom_call.1} parent=5 // pred_fallthru
        _
      %p317 = scmp.le.s32.totalorder 1, %s38
      %p318 = scmp.lt.s32.totalorder %s38, 17
      %p319 = pnand %p317, %p318
      %p320 = pneg %p319
      // Predicated region
      $region41: #{tpu_custom_call.1} parent=5 // pred_check
        _
      $region42: #{tpu_custom_call.1} parent=5 // pred_check_branch
        %322 = sbr.rel (%p319) target = $region44
      $region43: #{tpu_custom_call.1} parent=5 // pred_region
        %s323 = ssub.s32 %s38, 1
        // Predicated region
        $region45: #{tpu_custom_call.1} parent=43 // pred_check
          %p324 = pneg %p71
        $region46: #{tpu_custom_call.1} parent=43 // pred_check_branch
          %326 = sbr.rel (%p324) target = $region48
        $region47: #{tpu_custom_call.1} parent=43 // pred_region
          %328 = dma.done [#allocation8], 16
        $region48: #{tpu_custom_call.1} parent=43 // pred_fallthru
          _
        // Predicated region
        $region49: #{tpu_custom_call.1} parent=43 // pred_check
          %p329 = pneg %p92
        $region50: #{tpu_custom_call.1} parent=43 // pred_check_branch
          %331 = sbr.rel (%p329) target = $region52
        $region51: #{tpu_custom_call.1} parent=43 // pred_region
          %333 = dma.done [#allocation10], 16
        $region52: #{tpu_custom_call.1} parent=43 // pred_fallthru
          _
        %s334 = sand.u32 %s109, 1
        %s335 = scalar_lea.sflag [#allocation6], %s334
        %s336 = sand.u32 %s109, 1
        %s337 = smul.addr %s336, 64
        %s338 = scalar_lea.vmem [#allocation11], %s337
        // Predicated region
        $region53: #{tpu_custom_call.1} parent=43 // pred_check
          %p339 = pneg %p122
        $region54: #{tpu_custom_call.1} parent=43 // pred_check_branch
          %341 = sbr.rel (%p339) target = $region56
        $region55: #{tpu_custom_call.1} parent=43 // pred_region
          %343 = dma.done %s335, 1024
        $region56: #{tpu_custom_call.1} parent=43 // pred_fallthru
          _
        %s344 = sand.u32 %s139, 1
        %s345 = scalar_lea.sflag [#allocation13], %s344
        %s346 = sand.u32 %s139, 1
        %s347 = smul.addr %s346, 64
        %s348 = scalar_lea.vmem [#allocation12], %s347
        // Predicated region
        $region57: #{tpu_custom_call.1} parent=43 // pred_check
          %p349 = pneg %p152
        $region58: #{tpu_custom_call.1} parent=43 // pred_check_branch
          %351 = sbr.rel (%p349) target = $region60
        $region59: #{tpu_custom_call.1} parent=43 // pred_region
          %353 = dma.done %s345, 1024
        $region60: #{tpu_custom_call.1} parent=43 // pred_fallthru
          _
        %354 = sfence
        %p355 = pneg %p71
        %p356 = pneg %p68
        %p357 = pneg %p92
        %p358 = pneg %p89
        %s359 = sand.u32 %s109, 1
        %s360 = scalar_lea.sflag [#allocation6], %s359
        %s361 = sand.u32 %s109, 1
        %s362 = smul.addr %s361, 64
        %s363 = scalar_lea.vmem [#allocation11], %s362
        %p364 = pneg %p122
        %p365 = pneg %p119
        %s366 = sand.u32 %s139, 1
        %s367 = scalar_lea.sflag [#allocation13], %s366
        %s368 = sand.u32 %s139, 1
        %s369 = smul.addr %s368, 64
        %s370 = scalar_lea.vmem [#allocation12], %s369
        %p371 = pneg %p152
        %p372 = pneg %p149
        %p373 = pneg %p173
        %p374 = pneg %p170
        %p375 = pneg %p194
        %p376 = pneg %p191
        %p377 = pneg %p222
        %p378 = pneg %p219
        %s379 = sand.u32 %s209, 1
        %s380 = scalar_lea.sflag [#allocation7], %s379
        %s381 = sand.u32 %s209, 1
        %s382 = smul.addr %s381, 128
        %s383 = scalar_lea.vmem [#allocation14], %s382
        %s384 = sld [smem:[#allocation3 + %s48]]
        %s385 = smul.u32 8, %s47
        %s386 = sld [smem:[#allocation4 + %s48]]
        %s387 = smul.u32 8, %s47
        %s388 = smul.u32 8, %s47
        %s390 = sld [smem:[#allocation5 + %s48]]
        %s391 = sld [smem:[#allocation9 + %s48]]
        %v392 = vld [vmem:[%s338] sm:$0xff]
        %v393 = vld [vmem:[%s338 + $0x8] sm:$0xff]
        %v394 = vld [vmem:[%s338 + $0x10] sm:$0xff]
        %v395 = vld [vmem:[%s338 + $0x18] sm:$0xff]
        %v396 = vld [vmem:[%s338 + $0x20] sm:$0xff]
        %v397 = vld [vmem:[%s338 + $0x28] sm:$0xff]
        %v398 = vld [vmem:[%s338 + $0x30] sm:$0xff]
        %v399 = vld [vmem:[%s338 + $0x38] sm:$0xff]
        %v400 = vld [vmem:[%s348] sm:$0xff]
        %v401 = vld [vmem:[%s348 + $0x8] sm:$0xff]
        %v402 = vld [vmem:[%s348 + $0x10] sm:$0xff]
        %v403 = vld [vmem:[%s348 + $0x18] sm:$0xff]
        %v404 = vld [vmem:[%s348 + $0x20] sm:$0xff]
        %v405 = vld [vmem:[%s348 + $0x28] sm:$0xff]
        %v406 = vld [vmem:[%s348 + $0x30] sm:$0xff]
        %v407 = vld [vmem:[%s348 + $0x38] sm:$0xff]
        %v408 = vstv %s390
        %v409 = vmul.f32 %v408, %v392
        %v410 = vmul.f32 %v408, %v393
        %v411 = vmul.f32 %v408, %v394
        %v412 = vmul.f32 %v408, %v395
        %v413 = vmul.f32 %v408, %v396
        %v414 = vmul.f32 %v408, %v397
        %v415 = vmul.f32 %v408, %v398
        %v416 = vmul.f32 %v408, %v399
        %v417 = vstv %s391
        %v418 = vmul.f32 %v417, %v400
        %v419 = vmul.f32 %v417, %v401
        %v420 = vmul.f32 %v417, %v402
        %v421 = vmul.f32 %v417, %v403
        %v422 = vmul.f32 %v417, %v404
        %v423 = vmul.f32 %v417, %v405
        %v424 = vmul.f32 %v417, %v406
        %v425 = vmul.f32 %v417, %v407
        %v426 = vadd.f32 %v409, %v418
        %v427 = vadd.f32 %v410, %v419
        %v428 = vadd.f32 %v411, %v420
        %v429 = vadd.f32 %v412, %v421
        %v430 = vadd.f32 %v413, %v422
        %v431 = vadd.f32 %v414, %v423
        %v432 = vadd.f32 %v415, %v424
        %v433 = vadd.f32 %v416, %v425
        %v434 = vld [vmem:[%s6] sm:$0xf]
        %v435 = vld [vmem:[%s6 + $0x4] sm:$0xf]
        %v436 = vpack.c.bf16 %v426, %v426
        %v437 = vpack.c.bf16 %v427, %v427
        %v438 = vpack.c.bf16 %v428, %v428
        %v439 = vpack.c.bf16 %v429, %v429
        %v440 = vpack.c.bf16 %v430, %v430
        %v441 = vpack.c.bf16 %v431, %v431
        %v442 = vpack.c.bf16 %v432, %v432
        %v443 = vpack.c.bf16 %v433, %v433
        %v446 = vunpack.c.l.b16 %v434
        %v447 = vunpack.c.l.b16 %v435
        %v448 = vpack.c.b16 %v447, %v446
        %vm449 = vcmask 64512
        %v451 = vsel %vm449, %v436, 0
        %v454 = vsel %vm449, %v448, 0
        %456 = vmatpush.bf16.xpose.msra.mxu0 0
        %457 = vmatpush.bf16.xpose.msra.mxu0 0
        %458 = vmatpush.bf16.xpose.msra.mxu0 0
        %459 = vmatpush.bf16.xpose.msra.mxu0 0
        %460 = vmatpush.bf16.xpose.msra.mxu0 0
        %461 = vmatpush.bf16.xpose.msra.mxu0 0
        %462 = vmatpush.bf16.xpose.msra.mxu0 0
        %463 = vmatpush.bf16.xpose.msra.mxu0 %v454
        %464 = vmatmul.bf16.gmra.mxu0 %v451
        %v465 = vpop.f32.mrf.mxu0
        %v466 = vadd.f32 0.0, %v465
        %v467 = vpop.f32.mrf.mxu0
        %468 = vdwg.mxu0
        %v470 = vsel %vm449, %v437, 0
        %472 = vmatpush.bf16.xpose.msra.mxu0 0
        %473 = vmatpush.bf16.xpose.msra.mxu0 0
        %474 = vmatpush.bf16.xpose.msra.mxu0 0
        %475 = vmatpush.bf16.xpose.msra.mxu0 0
        %476 = vmatpush.bf16.xpose.msra.mxu0 0
        %477 = vmatpush.bf16.xpose.msra.mxu0 0
        %478 = vmatpush.bf16.xpose.msra.mxu0 0
        %479 = vmatpush.bf16.xpose.msra.mxu0 %v454
        %480 = vmatmul.bf16.gmra.mxu0 %v470
        %v481 = vpop.f32.mrf.mxu0
        %v482 = vadd.f32 0.0, %v481
        %v483 = vpop.f32.mrf.mxu0
        %484 = vdwg.mxu0
        %v486 = vsel %vm449, %v438, 0
        %488 = vmatpush.bf16.xpose.msra.mxu0 0
        %489 = vmatpush.bf16.xpose.msra.mxu0 0
        %490 = vmatpush.bf16.xpose.msra.mxu0 0
        %491 = vmatpush.bf16.xpose.msra.mxu0 0
        %492 = vmatpush.bf16.xpose.msra.mxu0 0
        %493 = vmatpush.bf16.xpose.msra.mxu0 0
        %494 = vmatpush.bf16.xpose.msra.mxu0 0
        %495 = vmatpush.bf16.xpose.msra.mxu0 %v454
        %496 = vmatmul.bf16.gmra.mxu0 %v486
        %v497 = vpop.f32.mrf.mxu0
        %v498 = vadd.f32 0.0, %v497
        %v499 = vpop.f32.mrf.mxu0
        %500 = vdwg.mxu0
        %v502 = vsel %vm449, %v439, 0
        %504 = vmatpush.bf16.xpose.msra.mxu0 0
        %505 = vmatpush.bf16.xpose.msra.mxu0 0
        %506 = vmatpush.bf16.xpose.msra.mxu0 0
        %507 = vmatpush.bf16.xpose.msra.mxu0 0
        %508 = vmatpush.bf16.xpose.msra.mxu0 0
        %509 = vmatpush.bf16.xpose.msra.mxu0 0
        %510 = vmatpush.bf16.xpose.msra.mxu0 0
        %511 = vmatpush.bf16.xpose.msra.mxu0 %v454
        %512 = vmatmul.bf16.gmra.mxu0 %v502
        %v513 = vpop.f32.mrf.mxu0
        %v514 = vadd.f32 0.0, %v513
        %v515 = vpop.f32.mrf.mxu0
        %516 = vdwg.mxu0
        %v518 = vsel %vm449, %v440, 0
        %520 = vmatpush.bf16.xpose.msra.mxu0 0
        %521 = vmatpush.bf16.xpose.msra.mxu0 0
        %522 = vmatpush.bf16.xpose.msra.mxu0 0
        %523 = vmatpush.bf16.xpose.msra.mxu0 0
        %524 = vmatpush.bf16.xpose.msra.mxu0 0
        %525 = vmatpush.bf16.xpose.msra.mxu0 0
        %526 = vmatpush.bf16.xpose.msra.mxu0 0
        %527 = vmatpush.bf16.xpose.msra.mxu0 %v454
        %528 = vmatmul.bf16.gmra.mxu0 %v518
        %v529 = vpop.f32.mrf.mxu0
        %v530 = vadd.f32 0.0, %v529
        %v531 = vpop.f32.mrf.mxu0
        %532 = vdwg.mxu0
        %v534 = vsel %vm449, %v441, 0
        %536 = vmatpush.bf16.xpose.msra.mxu0 0
        %537 = vmatpush.bf16.xpose.msra.mxu0 0
        %538 = vmatpush.bf16.xpose.msra.mxu0 0
        %539 = vmatpush.bf16.xpose.msra.mxu0 0
        %540 = vmatpush.bf16.xpose.msra.mxu0 0
        %541 = vmatpush.bf16.xpose.msra.mxu0 0
        %542 = vmatpush.bf16.xpose.msra.mxu0 0
        %543 = vmatpush.bf16.xpose.msra.mxu0 %v454
        %544 = vmatmul.bf16.gmra.mxu0 %v534
        %v545 = vpop.f32.mrf.mxu0
        %v546 = vadd.f32 0.0, %v545
        %v547 = vpop.f32.mrf.mxu0
        %548 = vdwg.mxu0
        %v550 = vsel %vm449, %v442, 0
        %552 = vmatpush.bf16.xpose.msra.mxu0 0
        %553 = vmatpush.bf16.xpose.msra.mxu0 0
        %554 = vmatpush.bf16.xpose.msra.mxu0 0
        %555 = vmatpush.bf16.xpose.msra.mxu0 0
        %556 = vmatpush.bf16.xpose.msra.mxu0 0
        %557 = vmatpush.bf16.xpose.msra.mxu0 0
        %558 = vmatpush.bf16.xpose.msra.mxu0 0
        %559 = vmatpush.bf16.xpose.msra.mxu0 %v454
        %560 = vmatmul.bf16.gmra.mxu0 %v550
        %v561 = vpop.f32.mrf.mxu0
        %v562 = vadd.f32 0.0, %v561
        %v563 = vpop.f32.mrf.mxu0
        %564 = vdwg.mxu0
        %v566 = vsel %vm449, %v443, 0
        %568 = vmatpush.bf16.xpose.msra.mxu0 0
        %569 = vmatpush.bf16.xpose.msra.mxu0 0
        %570 = vmatpush.bf16.xpose.msra.mxu0 0
        %571 = vmatpush.bf16.xpose.msra.mxu0 0
        %572 = vmatpush.bf16.xpose.msra.mxu0 0
        %573 = vmatpush.bf16.xpose.msra.mxu0 0
        %574 = vmatpush.bf16.xpose.msra.mxu0 0
        %575 = vmatpush.bf16.xpose.msra.mxu0 %v454
        %576 = vmatmul.bf16.gmra.mxu0 %v566
        %v577 = vpop.f32.mrf.mxu0
        %v578 = vadd.f32 0.0, %v577
        %v579 = vpop.f32.mrf.mxu0
        %580 = vdwg.mxu0
        %v581 = vld [vmem:[%s7] sm:$0xf]
        %v582 = vld [vmem:[%s7 + $0x4] sm:$0xf]
        %v583 = vpack.c.bf16 %v466, %v466
        %v584 = vpack.c.bf16 %v482, %v482
        %v585 = vpack.c.bf16 %v498, %v498
        %v586 = vpack.c.bf16 %v514, %v514
        %v587 = vpack.c.bf16 %v530, %v530
        %v588 = vpack.c.bf16 %v546, %v546
        %v589 = vpack.c.bf16 %v562, %v562
        %v590 = vpack.c.bf16 %v578, %v578
        %v593 = vunpack.c.l.b16 %v581
        %v594 = vunpack.c.l.b16 %v582
        %v595 = vpack.c.b16 %v594, %v593
        %v597 = vsel %vm449, %v595, 0
        %vm599 = vcmask 1043456
        %v601 = vsel %vm599, %v583, 0
        %603 = vmatpush.bf16.msra.mxu0 0
        %604 = vmatpush.bf16.msra.mxu0 0
        %605 = vmatpush.bf16.msra.mxu0 0
        %606 = vmatpush.bf16.msra.mxu0 0
        %607 = vmatpush.bf16.msra.mxu0 0
        %608 = vmatpush.bf16.msra.mxu0 0
        %609 = vmatpush.bf16.msra.mxu0 0
        %610 = vmatpush.bf16.msra.mxu0 %v601
        %611 = vmatmul.bf16.gmra.mxu0 %v597
        %v612 = vpop.f32.mrf.mxu0
        %v613 = vadd.f32 0.0, %v612
        %v614 = vpop.f32.mrf.mxu0
        %v615 = vadd.f32 0.0, %v614
        %616 = vdwg.mxu0
        %v618 = vsel %vm599, %v584, 0
        %620 = vmatpush.bf16.msra.mxu0 0
        %621 = vmatpush.bf16.msra.mxu0 0
        %622 = vmatpush.bf16.msra.mxu0 0
        %623 = vmatpush.bf16.msra.mxu0 0
        %624 = vmatpush.bf16.msra.mxu0 0
        %625 = vmatpush.bf16.msra.mxu0 0
        %626 = vmatpush.bf16.msra.mxu0 0
        %627 = vmatpush.bf16.msra.mxu0 %v618
        %628 = vmatmul.bf16.gmra.mxu0 %v597
        %v629 = vpop.f32.mrf.mxu0
        %v630 = vadd.f32 0.0, %v629
        %v631 = vpop.f32.mrf.mxu0
        %v632 = vadd.f32 0.0, %v631
        %633 = vdwg.mxu0
        %v635 = vsel %vm599, %v585, 0
        %637 = vmatpush.bf16.msra.mxu0 0
        %638 = vmatpush.bf16.msra.mxu0 0
        %639 = vmatpush.bf16.msra.mxu0 0
        %640 = vmatpush.bf16.msra.mxu0 0
        %641 = vmatpush.bf16.msra.mxu0 0
        %642 = vmatpush.bf16.msra.mxu0 0
        %643 = vmatpush.bf16.msra.mxu0 0
        %644 = vmatpush.bf16.msra.mxu0 %v635
        %645 = vmatmul.bf16.gmra.mxu0 %v597
        %v646 = vpop.f32.mrf.mxu0
        %v647 = vadd.f32 0.0, %v646
        %v648 = vpop.f32.mrf.mxu0
        %v649 = vadd.f32 0.0, %v648
        %650 = vdwg.mxu0
        %v652 = vsel %vm599, %v586, 0
        %654 = vmatpush.bf16.msra.mxu0 0
        %655 = vmatpush.bf16.msra.mxu0 0
        %656 = vmatpush.bf16.msra.mxu0 0
        %657 = vmatpush.bf16.msra.mxu0 0
        %658 = vmatpush.bf16.msra.mxu0 0
        %659 = vmatpush.bf16.msra.mxu0 0
        %660 = vmatpush.bf16.msra.mxu0 0
        %661 = vmatpush.bf16.msra.mxu0 %v652
        %662 = vmatmul.bf16.gmra.mxu0 %v597
        %v663 = vpop.f32.mrf.mxu0
        %v664 = vadd.f32 0.0, %v663
        %v665 = vpop.f32.mrf.mxu0
        %v666 = vadd.f32 0.0, %v665
        %667 = vdwg.mxu0
        %v669 = vsel %vm599, %v587, 0
        %671 = vmatpush.bf16.msra.mxu0 0
        %672 = vmatpush.bf16.msra.mxu0 0
        %673 = vmatpush.bf16.msra.mxu0 0
        %674 = vmatpush.bf16.msra.mxu0 0
        %675 = vmatpush.bf16.msra.mxu0 0
        %676 = vmatpush.bf16.msra.mxu0 0
        %677 = vmatpush.bf16.msra.mxu0 0
        %678 = vmatpush.bf16.msra.mxu0 %v669
        %679 = vmatmul.bf16.gmra.mxu0 %v597
        %v680 = vpop.f32.mrf.mxu0
        %v681 = vadd.f32 0.0, %v680
        %v682 = vpop.f32.mrf.mxu0
        %v683 = vadd.f32 0.0, %v682
        %684 = vdwg.mxu0
        %v686 = vsel %vm599, %v588, 0
        %688 = vmatpush.bf16.msra.mxu0 0
        %689 = vmatpush.bf16.msra.mxu0 0
        %690 = vmatpush.bf16.msra.mxu0 0
        %691 = vmatpush.bf16.msra.mxu0 0
        %692 = vmatpush.bf16.msra.mxu0 0
        %693 = vmatpush.bf16.msra.mxu0 0
        %694 = vmatpush.bf16.msra.mxu0 0
        %695 = vmatpush.bf16.msra.mxu0 %v686
        %696 = vmatmul.bf16.gmra.mxu0 %v597
        %v697 = vpop.f32.mrf.mxu0
        %v698 = vadd.f32 0.0, %v697
        %v699 = vpop.f32.mrf.mxu0
        %v700 = vadd.f32 0.0, %v699
        %701 = vdwg.mxu0
        %v703 = vsel %vm599, %v589, 0
        %705 = vmatpush.bf16.msra.mxu0 0
        %706 = vmatpush.bf16.msra.mxu0 0
        %707 = vmatpush.bf16.msra.mxu0 0
        %708 = vmatpush.bf16.msra.mxu0 0
        %709 = vmatpush.bf16.msra.mxu0 0
        %710 = vmatpush.bf16.msra.mxu0 0
        %711 = vmatpush.bf16.msra.mxu0 0
        %712 = vmatpush.bf16.msra.mxu0 %v703
        %713 = vmatmul.bf16.gmra.mxu0 %v597
        %v714 = vpop.f32.mrf.mxu0
        %v715 = vadd.f32 0.0, %v714
        %v716 = vpop.f32.mrf.mxu0
        %v717 = vadd.f32 0.0, %v716
        %718 = vdwg.mxu0
        %v720 = vsel %vm599, %v590, 0
        %722 = vmatpush.bf16.msra.mxu0 0
        %723 = vmatpush.bf16.msra.mxu0 0
        %724 = vmatpush.bf16.msra.mxu0 0
        %725 = vmatpush.bf16.msra.mxu0 0
        %726 = vmatpush.bf16.msra.mxu0 0
        %727 = vmatpush.bf16.msra.mxu0 0
        %728 = vmatpush.bf16.msra.mxu0 0
        %729 = vmatpush.bf16.msra.mxu0 %v720
        %730 = vmatmul.bf16.gmra.mxu0 %v597
        %v731 = vpop.f32.mrf.mxu0
        %v732 = vadd.f32 0.0, %v731
        %v733 = vpop.f32.mrf.mxu0
        %v734 = vadd.f32 0.0, %v733
        %735 = vdwg.mxu0
        %vm736 = vcmask 130048
        %737 = vst.msk [vmem:[%s383] sm:$0xff] %vm736, %v613
        %738 = vst.msk [vmem:[%s383 + $0x8] sm:$0xff] %vm736, %v615
        %739 = vst.msk [vmem:[%s383 + $0x10] sm:$0xff] %vm736, %v630
        %740 = vst.msk [vmem:[%s383 + $0x18] sm:$0xff] %vm736, %v632
        %741 = vst.msk [vmem:[%s383 + $0x20] sm:$0xff] %vm736, %v647
        %742 = vst.msk [vmem:[%s383 + $0x28] sm:$0xff] %vm736, %v649
        %743 = vst.msk [vmem:[%s383 + $0x30] sm:$0xff] %vm736, %v664
        %744 = vst.msk [vmem:[%s383 + $0x38] sm:$0xff] %vm736, %v666
        %745 = vst.msk [vmem:[%s383 + $0x40] sm:$0xff] %vm736, %v681
        %746 = vst.msk [vmem:[%s383 + $0x48] sm:$0xff] %vm736, %v683
        %747 = vst.msk [vmem:[%s383 + $0x50] sm:$0xff] %vm736, %v698
        %748 = vst.msk [vmem:[%s383 + $0x58] sm:$0xff] %vm736, %v700
        %749 = vst.msk [vmem:[%s383 + $0x60] sm:$0xff] %vm736, %v715
        %750 = vst.msk [vmem:[%s383 + $0x68] sm:$0xff] %vm736, %v717
        %751 = vst.msk [vmem:[%s383 + $0x70] sm:$0xff] %vm736, %v732
        %752 = vst.msk [vmem:[%s383 + $0x78] sm:$0xff] %vm736, %v734
        %s753 = sand.u32 %s209, 1
        %s754 = scalar_lea.sflag [#allocation7], %s753
        %s755 = sand.u32 %s209, 1
        %s756 = smul.addr %s755, 128
        %s757 = scalar_lea.vmem [#allocation14], %s756
        // Predicated region
        $region61: #{tpu_custom_call.1} parent=43 // pred_check
          %p758 = pneg %p219
        $region62: #{tpu_custom_call.1} parent=43 // pred_check_branch
          %760 = sbr.rel (%p758) target = $region64
        $region63: #{tpu_custom_call.1} parent=43 // pred_region
          #allocation16 [shape = 'u32[6]{0}', space=smem, size = 0x18, scoped, tag = 'DMA stride descriptor']
          %s761 = smul.u32 8, %s47
          %763 = vsyncadd %s754, 0
          %s764 = smul.addr %s48, 2
          %s765 = smul.addr %s761, 32
          %s766 = sadd.s32 %s764, %s765
          %s767 = smul.addr %s766, 8
          %s768 = scalar_lea.hbm %s8, %s767
          %s770 = sshll.u32 1, 14
          %s771 = sxor.u32 4294967295, %s770
          %s774 = sshll.u32 7, 18
          %s775 = sxor.u32 4294967295, %s774
          %s776 = sand.u32 0, %s775
          %s778 = sor.u32 %s776, 0
          %s779 = sshll.u32 %s757, 4
          %s780 = int_to_ptr.vmem [resolvable:$true] %s779
          %s781 = sshll.u32 %s768, 4
          %s782 = int_to_ptr.hbm [resolvable:$true] %s781
          %788 = sst [smem:[#allocation16]] 256
          %s789 = scalar_lea.smem [#allocation16], 1
          %790 = sst [smem:[%s789]] 4096
          %s791 = scalar_lea.smem [#allocation16], 2
          %792 = sst [smem:[%s791]] 2
          %s793 = scalar_lea.smem [#allocation16], 3
          %794 = sst [smem:[%s793]] 128
          %s795 = scalar_lea.smem [#allocation16], 4
          %796 = sst [smem:[%s795]] 128
          %s797 = scalar_lea.smem [#allocation16], 5
          %798 = sst [smem:[%s797]] 8
          %800 = dma.general %s780, 2048, %s782, %s754, [#allocation15], [#allocation16], %s778, 0
        $region64: #{tpu_custom_call.1} parent=43 // pred_fallthru
          _
      $region44: #{tpu_custom_call.1} parent=5 // pred_fallthru
        _
      %p801 = scmp.le.s32.totalorder 2, %s38
      // Predicated region
      $region65: #{tpu_custom_call.1} parent=5 // pred_check
        %p802 = pneg %p801
      $region66: #{tpu_custom_call.1} parent=5 // pred_check_branch
        %804 = sbr.rel (%p802) target = $region68
      $region67: #{tpu_custom_call.1} parent=5 // pred_region
        %s805 = ssub.s32 %s38, 2
        // Predicated region
        $region69: #{tpu_custom_call.1} parent=67 // pred_check
          %p806 = pneg %p225
        $region70: #{tpu_custom_call.1} parent=67 // pred_check_branch
          %808 = sbr.rel (%p806) target = $region72
        $region71: #{tpu_custom_call.1} parent=67 // pred_region
          %s809 = sand.u32 %s210, 1
          %s810 = scalar_lea.sflag [#allocation7], %s809
          %s811 = sand.u32 %s210, 1
          %s812 = smul.addr %s811, 128
          %s813 = scalar_lea.vmem [#allocation14], %s812
          %815 = dma.done %s810, 2048
        $region72: #{tpu_custom_call.1} parent=67 // pred_fallthru
          _
      $region68: #{tpu_custom_call.1} parent=5 // pred_fallthru
        _
    $region6: #{tpu_custom_call.1} parent=1 // loop_footer
      %s42 = sadd.s32 1, %s38
    $region7: #{tpu_custom_call.1} parent=1 // loop_footer_branch
      %37 = sbr.rel target = $region3
    $region8: #{tpu_custom_call.1} parent=1 // loop_exit
      _
    %816 = vsyncpa [#allocation6], 1
    %s817 = scalar_lea.sflag [#allocation6], 1
    %818 = vsyncpa %s817, 1
    %819 = vsyncpa [#allocation13], 1
    %s820 = scalar_lea.sflag [#allocation13], 1
    %821 = vsyncpa %s820, 1
    %822 = vsyncpa [#allocation7], 1
    %s823 = scalar_lea.sflag [#allocation7], 1
    %824 = vsyncpa %s823, 1
    %825 = vsyncpa [#allocation8], 1
    %s826 = scalar_lea.sflag [#allocation8], 1
    %827 = vsyncpa %s826, 1
    %828 = vsyncpa [#allocation10], 1

</llo_original>
